<compile_context>
chip_gen: v5e
topology: v5e:2x2
jax: 0.10.0
libtpu: 0.0.40
codegen_flags: <defaults>
</compile_context>

<pallas_src>
import jax
import jax.numpy as jnp
from jax.experimental import pallas as pl
from jax.experimental.pallas import tpu as pltpu

# Fixed filters of the PyTorch module (each /4); used only by the reference.
G1 = [[-1.0, 0.0, 1.0], [-2.0, 0.0, 2.0], [-1.0, 0.0, 1.0]]
G2 = [[1.0, 2.0, 1.0], [0.0, 0.0, 0.0], [-1.0, -2.0, -1.0]]
G3 = [[2.0, 1.0, 0.0], [1.0, 0.0, -1.0], [0.0, -1.0, -2.0]]
G4 = [[0.0, -1.0, -2.0], [1.0, 0.0, -1.0], [2.0, 1.0, 0.0]]
FILTERS = [[[c / 4.0 for c in row] for row in g] for g in (G1, G2, G3, G4)]

_BLOCK_BUDGET_BYTES = 2 * 1024 * 1024   # per-grid-step in+out blocks (x2 buffered)
_VMEM_LIMIT_BYTES = 32 * 1024 * 1024    # safe on v5e (128 MiB) / v6e (128) / v7x (64)
_MIN_GRID_STEPS = 4                     # pipelining + both v7x TensorCores


def _cdiv(a, b):
    return -(-a // b)


def _round_up(x, m):
    return _cdiv(x, m) * m


def _sobel_compute(img, ho, wo):
    """img: (B, R, W) f32 with R >= ho+2, W >= wo+2  ->  (B, ho, wo) f32."""
    # Column (lane) shifts: done once over the full strip height, reused by
    # all four filters.  Row shifts below are cheap sublane slices.
    # TODO(synk): if a bundle dump shows c1/c2 materializing block-sized
    # copies, switch to pltpu.roll on the full-width slab (XLU slot is idle).
    c0 = img[:, :ho + 2, 0:wo]
    c1 = img[:, :ho + 2, 1:wo + 1]
    c2 = img[:, :ho + 2, 2:wo + 2]

    d_col = c2 - c0              # horizontal [-1, 0, 1]
    s_col = (c0 + c2) + c1       # horizontal [ 1, 1, 1]
    t_col = s_col + c1           # horizontal [ 1, 2, 1]

    d0 = d_col[:, 0:ho]
    d1 = d_col[:, 1:ho + 1]
    d2 = d_col[:, 2:ho + 2]

    ds = (d0 + d2) + d1                                   # D0 + D1 + D2
    conv1 = ds + d1                                       # D0 + 2*D1 + D2
    conv2 = t_col[:, 0:ho] - t_col[:, 2:ho + 2]           # T0 - T2
    qs = s_col[:, 0:ho] - s_col[:, 2:ho + 2]              # S0 - S2
    # conv3 = QS - DS, conv4 = -(QS + DS)  =>  conv3^2 + conv4^2 = 2*(DS^2+QS^2)
    acc = (conv1 * conv1 + conv2 * conv2) + 2.0 * (ds * ds + qs * qs)
    # (filter/4)^2 -> 1/16, channel mean over 4 -> 1/4  ==>  1/64 total.
    return jnp.sqrt(acc * (1.0 / 64.0))


def _sobel_kernel(img_ref, out_ref):
    # img block: (bt, 1, H, W); out block: (bt, 1, H-2, W-2).
    out_ref[:, 0, :, :] = _sobel_compute(
        img_ref[:, 0, :, :], out_ref.shape[2], out_ref.shape[3])


def _sobel_kernel_strips(img_ref, halo_ref, out_ref, slab_ref):
    # img block : (1, 1, strip_h, W)   rows [r*strip_h, (r+1)*strip_h)
    # halo block: (1, 1, 8, W)         rows [(r+1)*strip_h, (r+1)*strip_h + 8)
    # slab_ref  : (1, strip_h + 8, W)  VMEM scratch (contiguous strip + halo)
    strip_h = img_ref.shape[2]
    slab_ref[:, :strip_h, :] = img_ref[:, 0, :, :]
    slab_ref[:, strip_h:, :] = halo_ref[:, 0, :, :]
    out_ref[:, 0, :, :] = _sobel_compute(
        slab_ref[:, :, :], out_ref.shape[2], out_ref.shape[3])


def sobel(img: jax.Array, *,
          block_budget_bytes: int = _BLOCK_BUDGET_BYTES,
          min_grid_steps: int = _MIN_GRID_STEPS) -> jax.Array:
    """img: (N, 1, H, W) float32 -> (N, 1, H-2, W-2) float32."""
    n, ch, h, w = img.shape
    assert ch == 1, "Sobel expects a single input channel"
    h_out, w_out = h - 2, w - 2
    assert h_out > 0 and w_out > 0
    img = img.astype(jnp.float32)

    bytes_per_image = 4 * (h * w + h_out * w_out)

    if bytes_per_image <= block_budget_bytes:
        # ---- small / medium frames: whole frame per block, batch-tiled. ----
        bt_vmem = max(1, block_budget_bytes // bytes_per_image)
        # Guarantee a multi-step grid (pipelining + v7x megacore) while
        # keeping each block under the VMEM budget; pad N instead of a
        # divisor search so prime/odd N never collapses to tiny steps.
        n_blocks = max(_cdiv(n, bt_vmem), min(n, min_grid_steps))
        bt = _cdiv(n, n_blocks)
        n_pad = bt * n_blocks
        if n_pad != n:
            img = jnp.pad(img, ((0, n_pad - n), (0, 0), (0, 0), (0, 0)))

        out = pl.pallas_call(
            _sobel_kernel,
            out_shape=jax.ShapeDtypeStruct((n_pad, 1, h_out, w_out),
                                           jnp.float32),
            grid=(n_blocks,),
            in_specs=[
                # Last two dims equal the full array dims -> legal, no padding.
                pl.BlockSpec((bt, 1, h, w), lambda bb: (bb, 0, 0, 0)),
            ],
            out_specs=pl.BlockSpec((bt, 1, h_out, w_out),
                                   lambda bb: (bb, 0, 0, 0)),
            compiler_params=pltpu.CompilerParams(
                dimension_semantics=("parallel",),
                vmem_limit_bytes=_VMEM_LIMIT_BYTES),
        )(img)
        return out[:n] if n_pad != n else out

    # ---- large frames: H-strip tiling with a 2-row halo (bounds VMEM). ----
    # strip_h: largest multiple of 8 whose (strip + 8-row halo) input block
    # plus output block fits the budget.
    denom = 4 * (w + w_out)
    strip_h = max(8, ((block_budget_bytes - 4 * 8 * w) // denom) // 8 * 8)
    strip_h = min(strip_h, _round_up(h_out, 8))
    h_out_p = _round_up(h_out, strip_h)
    num_strips = h_out_p // strip_h
    h_in_p = h_out_p + 8                       # room for the last strip's halo
    img = jnp.pad(img, ((0, 0), (0, 0), (0, h_in_p - h), (0, 0)))
    # TODO(synk): add W-tiling with a 2-column halo for extremely wide frames.

    halo_blocks_per_strip = strip_h // 8

    out = pl.pallas_call(
        _sobel_kernel_strips,
        out_shape=jax.ShapeDtypeStruct((n, 1, h_out_p, w_out), jnp.float32),
        grid=(n, num_strips),
        in_specs=[
            pl.BlockSpec((1, 1, strip_h, w),
                         lambda bb, rr: (bb, 0, rr, 0)),
            # Same array, viewed in 8-row blocks: the strip's 2-row halo is
            # the first 2 rows of the block that starts at (rr+1)*strip_h.
            pl.BlockSpec((1, 1, 8, w),
                         lambda bb, rr: (bb, 0,
                                         (rr + 1) * halo_blocks_per_strip, 0)),
        ],
        out_specs=pl.BlockSpec((1, 1, strip_h, w_out),
                               lambda bb, rr: (bb, 0, rr, 0)),
        scratch_shapes=[pltpu.VMEM((1, strip_h + 8, w), jnp.float32)],
        compiler_params=pltpu.CompilerParams(
            dimension_semantics=("parallel", "parallel"),
            vmem_limit_bytes=_VMEM_LIMIT_BYTES),
    )(img, img)
    return out[:, :, :h_out, :]


def sobel_ref(img: jax.Array) -> jax.Array:
    """Naive pure-JAX reference (explicit cross-correlation taps, f32)."""
    img = img.astype(jnp.float32)
    n, _, h, w = img.shape
    gw = jnp.asarray(FILTERS, dtype=jnp.float32)          # (4, 3, 3)
    x = img[:, 0]
    chans = []
    for f in range(4):
        acc = jnp.zeros((n, h - 2, w - 2), jnp.float32)
        for dy in range(3):
            for dx in range(3):
                acc = acc + gw[f, dy, dx] * x[:, dy:dy + h - 2, dx:dx + w - 2]
        chans.append(acc)
    s = sum(c * c for c in chans) / 4.0
    return jnp.sqrt(s)[:, None]


if __name__ == "__main__":
    k1, k2 = jax.random.split(jax.random.PRNGKey(0))

    # Main path (whole-frame blocks, batch-tiled).
    img = jax.random.normal(k1, (2, 1, 16, 16), dtype=jnp.float32)
    out = jax.block_until_ready(sobel(img))
    ref = sobel_ref(img)
    assert out.shape == (2, 1, 14, 14), out.shape
    assert jnp.allclose(out, ref, atol=1e-5, rtol=1e-5), \
        float(jnp.max(jnp.abs(out - ref)))

    # Large-frame H-strip path, forced via a tiny block budget.
    img2 = jax.random.normal(k2, (2, 1, 32, 20), dtype=jnp.float32)
    out2 = jax.block_until_ready(sobel(img2, block_budget_bytes=4096))
    ref2 = sobel_ref(img2)
    assert out2.shape == (2, 1, 30, 18), out2.shape
    assert jnp.allclose(out2, ref2, atol=1e-5, rtol=1e-5), \
        float(jnp.max(jnp.abs(out2 - ref2)))

    print("KERNEL_OK")
</pallas_src>

<mosaic_0001>
module attributes {stable_mosaic.version = 11 : i64} {
  func.func @_sobel_kernel(%arg0: i32, %arg1: memref<1x1x16x16xf32, #tpu.memory_space<vmem>>, %arg2: memref<1x1x14x14xf32, #tpu.memory_space<vmem>>) attributes {dimension_semantics = [#tpu.dimension_semantics<parallel>], iteration_bounds = array<i64: 2>, scalar_prefetch = 0 : i64, scratch_operands = 0 : i64, tpu.core_type = #tpu.core_type<tc>, window_params = [{transform_indices = @transform_0, window_bounds = array<i64: 1, 1, 16, 16>}, {transform_indices = @transform_1, window_bounds = array<i64: 1, 1, 14, 14>}]} {
    %c0 = arith.constant 0 : index
    %c0_0 = arith.constant 0 : index
    %c0_1 = arith.constant 0 : index
    %c0_2 = arith.constant 0 : index
    %0 = vector.load %arg1[%c0, %c0_0, %c0_1, %c0_2] : memref<1x1x16x16xf32, #tpu.memory_space<vmem>>, vector<1x1x16x16xf32>
    %1 = vector.shape_cast %0 : vector<1x1x16x16xf32> to vector<1x16x16xf32>
    %2 = vector.extract_strided_slice %1 {offsets = [0, 0, 0], sizes = [1, 16, 14], strides = [1, 1, 1]} : vector<1x16x16xf32> to vector<1x16x14xf32>
    %3 = vector.extract_strided_slice %1 {offsets = [0, 0, 1], sizes = [1, 16, 14], strides = [1, 1, 1]} : vector<1x16x16xf32> to vector<1x16x14xf32>
    %4 = vector.extract_strided_slice %1 {offsets = [0, 0, 2], sizes = [1, 16, 14], strides = [1, 1, 1]} : vector<1x16x16xf32> to vector<1x16x14xf32>
    %5 = arith.subf %4, %2 : vector<1x16x14xf32>
    %6 = arith.addf %2, %4 : vector<1x16x14xf32>
    %7 = arith.addf %6, %3 : vector<1x16x14xf32>
    %8 = arith.addf %7, %3 : vector<1x16x14xf32>
    %9 = vector.extract_strided_slice %5 {offsets = [0, 0, 0], sizes = [1, 14, 14], strides = [1, 1, 1]} : vector<1x16x14xf32> to vector<1x14x14xf32>
    %10 = vector.extract_strided_slice %5 {offsets = [0, 1, 0], sizes = [1, 14, 14], strides = [1, 1, 1]} : vector<1x16x14xf32> to vector<1x14x14xf32>
    %11 = vector.extract_strided_slice %5 {offsets = [0, 2, 0], sizes = [1, 14, 14], strides = [1, 1, 1]} : vector<1x16x14xf32> to vector<1x14x14xf32>
    %12 = arith.addf %9, %11 : vector<1x14x14xf32>
    %13 = arith.addf %12, %10 : vector<1x14x14xf32>
    %14 = arith.addf %13, %10 : vector<1x14x14xf32>
    %15 = vector.extract_strided_slice %8 {offsets = [0, 0, 0], sizes = [1, 14, 14], strides = [1, 1, 1]} : vector<1x16x14xf32> to vector<1x14x14xf32>
    %16 = vector.extract_strided_slice %8 {offsets = [0, 2, 0], sizes = [1, 14, 14], strides = [1, 1, 1]} : vector<1x16x14xf32> to vector<1x14x14xf32>
    %17 = arith.subf %15, %16 : vector<1x14x14xf32>
    %18 = vector.extract_strided_slice %7 {offsets = [0, 0, 0], sizes = [1, 14, 14], strides = [1, 1, 1]} : vector<1x16x14xf32> to vector<1x14x14xf32>
    %19 = vector.extract_strided_slice %7 {offsets = [0, 2, 0], sizes = [1, 14, 14], strides = [1, 1, 1]} : vector<1x16x14xf32> to vector<1x14x14xf32>
    %20 = arith.subf %18, %19 : vector<1x14x14xf32>
    %21 = arith.mulf %14, %14 : vector<1x14x14xf32>
    %22 = arith.mulf %17, %17 : vector<1x14x14xf32>
    %23 = arith.addf %21, %22 : vector<1x14x14xf32>
    %24 = arith.mulf %13, %13 : vector<1x14x14xf32>
    %25 = arith.mulf %20, %20 : vector<1x14x14xf32>
    %26 = arith.addf %24, %25 : vector<1x14x14xf32>
    %cst = arith.constant 2.000000e+00 : f32
    %27 = vector.broadcast %cst : f32 to vector<1x14x14xf32>
    %28 = arith.mulf %27, %26 : vector<1x14x14xf32>
    %29 = arith.addf %23, %28 : vector<1x14x14xf32>
    %cst_3 = arith.constant 1.562500e-02 : f32
    %30 = vector.broadcast %cst_3 : f32 to vector<1x14x14xf32>
    %31 = arith.mulf %29, %30 : vector<1x14x14xf32>
    %32 = math.sqrt %31 : vector<1x14x14xf32>
    %c0_4 = arith.constant 0 : index
    %c0_5 = arith.constant 0 : index
    %c0_6 = arith.constant 0 : index
    %c0_7 = arith.constant 0 : index
    %33 = vector.load %arg2[%c0_4, %c0_5, %c0_6, %c0_7] : memref<1x1x14x14xf32, #tpu.memory_space<vmem>>, vector<1x1x14x14xf32>
    %34 = vector.shape_cast %33 : vector<1x1x14x14xf32> to vector<1x14x14xf32>
    %35 = vector.shape_cast %32 : vector<1x14x14xf32> to vector<1x1x14x14xf32>
    tpu.vector_store %arg2[%c0_4, %c0_5, %c0_6, %c0_7], %35 {strides = array<i32>} : memref<1x1x14x14xf32, #tpu.memory_space<vmem>>, vector<1x1x14x14xf32>,
    return
  }
  func.func @transform_0(%arg0: i32) -> (i32, i32, i32, i32) {
    %c0_i32 = arith.constant 0 : i32
    %c0_i32_0 = arith.constant 0 : i32
    %c0_i32_1 = arith.constant 0 : i32
    %c0_i32_2 = arith.constant 0 : i32
    return %arg0, %c0_i32, %c0_i32_0, %c0_i32_1 : i32, i32, i32, i32
  }
  func.func @transform_1(%arg0: i32) -> (i32, i32, i32, i32) {
    %c0_i32 = arith.constant 0 : i32
    %c0_i32_0 = arith.constant 0 : i32
    %c0_i32_1 = arith.constant 0 : i32
    %c0_i32_2 = arith.constant 0 : i32
    return %arg0, %c0_i32, %c0_i32_0, %c0_i32_1 : i32, i32, i32, i32
  }
}

</mosaic_0001>

<llo_original>
// kernel: tpu_custom_call.1
$region0: #{tpu_custom_call.1}
  #allocation0 [shape = 'u32[]', space=smem, size = 0x4, offset = 0x4, fixed_abs, tag = 'smem constant byte address 0x4 - core index']
  #allocation1 [shape = 'u32[72,128]{1,0:T(1,128)}', space=vmem, size = 0x9000, scoped, tag = 'internal scratch']
  %s0 = inlined_call_operand.hbm [shape: f32[2,1,16,16], index: 0, kind: input, shape index: {}]
  %s1 = inlined_call_operand.vmem [shape: f32[2,1,14,14], index: 1, kind: output, shape index: {}]
  %s2 = sld [smem:[#allocation0]]
  $region41: #{tpu_custom_call.1} parent=0
    _
  %s4 = ssub.s32 1, %s2
  %s5 = scalar_select 0, %s4, %s2
  $region1: #{tpu_custom_call.1} parent=0
    #allocation2 [shape = 'u8[16384]{0}', space=vmem, size = 0x4000, scoped, tag = 'input window, operand 0']
    #allocation3 [shape = 's32[2]{0}', space=sflag, size = 0x8, scoped, tag = 'scoped memory for tpu_custom_call.1']
    %6 = vsyncpa [#allocation3], 0
    %s7 = scalar_lea.sflag [#allocation3], 1
    %8 = vsyncpa %s7, 0
    loop: start=0, step=1, limit=4
    $region2: #{tpu_custom_call.1} parent=1 // loop_pre_header
      _
    $region3: #{tpu_custom_call.1} parent=1 // loop_header
      %s10 = sphi 0, %s14
      %p11 = scmp.ge.s32.totalorder %s10, 4
      %s20 = sphi 0, %s22
      %s23 = sphi 0, %s20
      %s24 = sphi 0, %s23
      %s40 = sphi 0, %s24
      %s46 = sphi 0, %s48
      %s49 = sphi 0, %s46
      %s50 = sphi 0, %s49
      %s66 = sphi 0, %s50
    $region4: #{tpu_custom_call.1} parent=1 // loop_header_branch
      %13 = sbr.rel (%p11) target = $region8
    $region5: #{tpu_custom_call.1} parent=1 // loop_body
      %s15 = ssub.s32 %s10, 1
      %s16 = ssub.s32 %s10, 2
      %s17 = sadd.s32 %s10, 1
      %s18 = ssub.s32 %s10, %s17
      %p19 = scmp.eq.s32.totalorder %s18, 0
      %s21 = sadd.s32 %s20, 1
      %s22 = scalar_select %p19, %s20, %s21
      %p25 = pneg %p19
      %p26 = scmp.eq.s32.totalorder %s10, 1
      %p27 = por %p25, %p26
      %p28 = scmp.ne.s32.totalorder %s20, %s23
      %p29 = scmp.eq.s32.totalorder %s10, 0
      %p30 = por %p28, %p29
      %p31 = scmp.ne.s32.totalorder %s20, %s23
      %p32 = scmp.eq.s32.totalorder %s15, 1
      %p33 = por %p31, %p32
      %p34 = scmp.ne.s32.totalorder %s23, %s24
      %p35 = scmp.eq.s32.totalorder %s15, 0
      %p36 = por %p34, %p35
      %p37 = scmp.ne.s32.totalorder %s23, %s24
      %p38 = scmp.eq.s32.totalorder %s16, 1
      %p39 = por %p37, %p38
      %p41 = scmp.ne.s32.totalorder %s24, %s40
      %p42 = scmp.eq.s32.totalorder %s16, 0
      %p43 = por %p41, %p42
      %s44 = ssub.s32 %s10, %s17
      %p45 = scmp.eq.s32.totalorder %s44, 0
      %s47 = sadd.s32 %s46, 1
      %s48 = scalar_select %p45, %s46, %s47
      %p51 = pneg %p45
      %p52 = scmp.eq.s32.totalorder %s10, 1
      %p53 = por %p51, %p52
      %p54 = scmp.ne.s32.totalorder %s46, %s49
      %p55 = scmp.eq.s32.totalorder %s10, 0
      %p56 = por %p54, %p55
      %p57 = scmp.ne.s32.totalorder %s46, %s49
      %p58 = scmp.eq.s32.totalorder %s15, 1
      %p59 = por %p57, %p58
      %p60 = scmp.ne.s32.totalorder %s49, %s50
      %p61 = scmp.eq.s32.totalorder %s15, 0
      %p62 = por %p60, %p61
      %p63 = scmp.ne.s32.totalorder %s49, %s50
      %p64 = scmp.eq.s32.totalorder %s16, 1
      %p65 = por %p63, %p64
      %p67 = scmp.ne.s32.totalorder %s50, %s66
      %p68 = scmp.eq.s32.totalorder %s16, 0
      %p69 = por %p67, %p68
      %p70 = scmp.le.s32.totalorder 1, %s10
      %p71 = scmp.lt.s32.totalorder %s10, 3
      %p72 = pnand %p70, %p71
      %p73 = pneg %p72
      // Predicated region
      $region9: #{tpu_custom_call.1} parent=5 // pred_check
        _
      $region10: #{tpu_custom_call.1} parent=5 // pred_check_branch
        %75 = sbr.rel (%p72) target = $region12
      $region11: #{tpu_custom_call.1} parent=5 // pred_region
        %s76 = ssub.s32 %s10, 1
      $region12: #{tpu_custom_call.1} parent=5 // pred_fallthru
        _
      %p77 = scmp.lt.s32.totalorder %s10, 2
      // Predicated region
      $region13: #{tpu_custom_call.1} parent=5 // pred_check
        %p78 = pneg %p77
      $region14: #{tpu_custom_call.1} parent=5 // pred_check_branch
        %80 = sbr.rel (%p78) target = $region16
      $region15: #{tpu_custom_call.1} parent=5 // pred_region
        // Predicated region
        $region17: #{tpu_custom_call.1} parent=15 // pred_check
          %p81 = pneg %p30
        $region18: #{tpu_custom_call.1} parent=15 // pred_check_branch
          %83 = sbr.rel (%p81) target = $region20
        $region19: #{tpu_custom_call.1} parent=15 // pred_region
          %s84 = sand.u32 %s20, 1
          %s85 = scalar_lea.sflag [#allocation3], %s84
          %s86 = sand.u32 %s20, 1
          %s87 = smul.addr %s86, 16
          %s88 = scalar_lea.vmem [#allocation2], %s87
          %90 = vsyncadd %s85, 0
          %s91 = smul.addr %s10, 2
          %s92 = smul.addr %s91, 8
          %s93 = scalar_lea.hbm %s0, %s92
          %s94 = sshll.u32 %s93, 4
          %s95 = int_to_ptr.hbm [resolvable:$true] %s94
          %s96 = sshll.u32 %s88, 4
          %s97 = int_to_ptr.vmem [resolvable:$true] %s96
          %102 = dma.hbm_to_vmem [thread:$0]  %s95, 256, %s97, %s85, 128, 128, 8
        $region20: #{tpu_custom_call.1} parent=15 // pred_fallthru
          _
      $region16: #{tpu_custom_call.1} parent=5 // pred_fallthru
        _
      %p103 = scmp.le.s32.totalorder 1, %s10
      %p104 = scmp.lt.s32.totalorder %s10, 3
      %p105 = pnand %p103, %p104
      %p106 = pneg %p105
      // Predicated region
      $region21: #{tpu_custom_call.1} parent=5 // pred_check
        _
      $region22: #{tpu_custom_call.1} parent=5 // pred_check_branch
        %108 = sbr.rel (%p105) target = $region24
      $region23: #{tpu_custom_call.1} parent=5 // pred_region
        %s109 = ssub.s32 %s10, 1
        %s110 = sand.u32 %s23, 1
        %s111 = scalar_lea.sflag [#allocation3], %s110
        %s112 = sand.u32 %s23, 1
        %s113 = smul.addr %s112, 16
        %s114 = scalar_lea.vmem [#allocation2], %s113
        // Predicated region
        $region25: #{tpu_custom_call.1} parent=23 // pred_check
          %p115 = pneg %p36
        $region26: #{tpu_custom_call.1} parent=23 // pred_check_branch
          %117 = sbr.rel (%p115) target = $region28
        $region27: #{tpu_custom_call.1} parent=23 // pred_region
          %119 = dma.done %s111, 256
        $region28: #{tpu_custom_call.1} parent=23 // pred_fallthru
          _
        %s120 = sand.u32 %s23, 1
        %s121 = scalar_lea.sflag [#allocation3], %s120
        %s122 = sand.u32 %s23, 1
        %s123 = smul.addr %s122, 16
        %s124 = scalar_lea.vmem [#allocation2], %s123
        %p125 = pneg %p36
        %p126 = pneg %p33
        %p127 = pneg %p62
        %p128 = pneg %p59
        %p129 = scmp.lt.s32.totalorder %s15, 1
        %s130 = scalar_select %p129, %s15, 1
        %s131 = smul.addr %s130, 2
        %s132 = smul.addr %s131, 8
        %s133 = scalar_lea.vmem %s1, %s132
        %p134 = scmp.lt.s32.totalorder %s15, 1
        %s135 = scalar_select %p134, %s15, 1
        %s136 = smul.addr %s135, 2
        %s137 = smul.addr %s136, 8
        %s138 = scalar_lea.vmem %s1, %s137
        %v139 = vld [vmem:[%s114] sm:$0xff]
        %v140 = vld [vmem:[%s114 + $0x8] sm:$0xff]
        %143 = vrot.lane.b32.xlu0 %v139, 2
        %v144 = vpop.permute.xlu0 %143
        %145 = vrot.lane.b32.xlu0 %v140, 2
        %v146 = vpop.permute.xlu0 %145
        %v149 = vsub.f32 %v139, %v144
        %v150 = vsub.f32 %v140, %v146
        %151 = vrot.lane.b32.xlu0 %v139, 126
        %v152 = vpop.permute.xlu0 %151
        %153 = vrot.lane.b32.xlu0 %v140, 126
        %v154 = vpop.permute.xlu0 %153
        %v157 = vadd.f32 %v139, %v152
        %v158 = vadd.f32 %v140, %v154
        %159 = vrot.lane.b32.xlu0 %v139, 127
        %v160 = vpop.permute.xlu0 %159
        %161 = vrot.lane.b32.xlu0 %v140, 127
        %v162 = vpop.permute.xlu0 %161
        %v165 = vadd.f32 %v157, %v160
        %v166 = vadd.f32 %v158, %v162
        %v167 = vadd.f32 %v165, %v160
        %v168 = vadd.f32 %v166, %v162
        %vm171 = vcmask 1045504
        %v172 = vrot.slane %v149, 2
        %v173 = vrot.slane %v150, 2
        %v174 = vsel %vm171, %v172, %v173
        %v177 = vadd.f32 %v149, %v174
        %v178 = vadd.f32 %v150, %v173
        %vm179 = vcmask 1046528
        %v180 = vrot.slane %v149, 1
        %v181 = vrot.slane %v150, 1
        %v182 = vsel %vm179, %v180, %v181
        %v185 = vadd.f32 %v177, %v182
        %v186 = vadd.f32 %v178, %v181
        %v187 = vadd.f32 %v185, %v182
        %v188 = vadd.f32 %v186, %v181
        %v191 = vrot.slane %v167, 2
        %v192 = vrot.slane %v168, 2
        %v193 = vsel %vm171, %v191, %v192
        %v196 = vsub.f32 %v167, %v193
        %v197 = vsub.f32 %v168, %v192
        %v200 = vrot.slane %v165, 2
        %v201 = vrot.slane %v166, 2
        %v202 = vsel %vm171, %v200, %v201
        %v205 = vsub.f32 %v165, %v202
        %v206 = vsub.f32 %v166, %v201
        %v207 = vmul.f32 %v187, %v187
        %v208 = vmul.f32 %v188, %v188
        %v209 = vmul.f32 %v196, %v196
        %v210 = vmul.f32 %v197, %v197
        %213 = vrot.lane.b32.xlu0 %v209, 2
        %v214 = vpop.permute.xlu0 %213
        %215 = vrot.lane.b32.xlu0 %v210, 2
        %v216 = vpop.permute.xlu0 %215
        %v219 = vadd.f32 %v207, %v214
        %v220 = vadd.f32 %v208, %v216
        %v221 = vmul.f32 %v185, %v185
        %v222 = vmul.f32 %v186, %v186
        %v223 = vmul.f32 %v205, %v205
        %v224 = vmul.f32 %v206, %v206
        %227 = vrot.lane.b32.xlu0 %v223, 2
        %v228 = vpop.permute.xlu0 %227
        %229 = vrot.lane.b32.xlu0 %v224, 2
        %v230 = vpop.permute.xlu0 %229
        %v233 = vadd.f32 %v221, %v228
        %v234 = vadd.f32 %v222, %v230
        %v235 = vmul.f32 %v233, 2.0
        %v236 = vmul.f32 %v234, 2.0
        %v237 = vadd.f32 %v219, %v235
        %v238 = vadd.f32 %v220, %v236
        %v239 = vmul.f32 %v237, 0.015625
        %v240 = vmul.f32 %v238, 0.015625
        %v241 = vrsqrt.pop %v239
        %v242 = vmul.f32 %v241, %v239
        %v243 = vmul.f32 %v242, %v241
        %v244 = vmul.f32 0.5, %v243
        %v245 = vsub.f32 1.5, %v244
        %v246 = vmul.f32 %v241, %v245
        %v247 = vmul.f32 %v239, %v246
        %vm248 = vcmp.eq.f32.partialorder %v239, inf
        %v249 = vsel %vm248, %v239, %v247
        %vm250 = vcmp.eq.f32.partialorder %v239, 0.0
        %v251 = vand.u32 %v239, 2147483648
        %v252 = vsel %vm250, %v251, %v249
        %v253 = vrsqrt.pop %v240
        %v254 = vmul.f32 %v253, %v240
        %v255 = vmul.f32 %v254, %v253
        %v256 = vmul.f32 0.5, %v255
        %v257 = vsub.f32 1.5, %v256
        %v258 = vmul.f32 %v253, %v257
        %v259 = vmul.f32 %v240, %v258
        %vm260 = vcmp.eq.f32.partialorder %v240, inf
        %v261 = vsel %vm260, %v240, %v259
        %vm262 = vcmp.eq.f32.partialorder %v240, 0.0
        %v263 = vand.u32 %v240, 2147483648
        %v264 = vsel %vm262, %v263, %v261
        %267 = vrot.lane.b32.xlu0 %v252, 126
        %v268 = vpop.permute.xlu0 %267
        %269 = vrot.lane.b32.xlu0 %v264, 126
        %v270 = vpop.permute.xlu0 %269
        %vm273 = vcmask 113664
        %274 = vst.msk [vmem:[%s138] sm:$0xff] %vm273, %v268
        %vm275 = vcmask 111616
        %276 = vst.msk [vmem:[%s138 + $0x8] sm:$0x3f] %vm275, %v270
        %p277 = scmp.lt.s32.totalorder %s15, 1
        %s278 = scalar_select %p277, %s15, 1
        %s279 = smul.addr %s278, 2
        %s280 = smul.addr %s279, 8
        %s281 = scalar_lea.vmem %s1, %s280
        // Predicated region
        $region29: #{tpu_custom_call.1} parent=23 // pred_check
          %p282 = pneg %p59
        $region30: #{tpu_custom_call.1} parent=23 // pred_check_branch
          %284 = sbr.rel (%p282) target = $region32
        $region31: #{tpu_custom_call.1} parent=23 // pred_region
          _
        $region32: #{tpu_custom_call.1} parent=23 // pred_fallthru
          _
      $region24: #{tpu_custom_call.1} parent=5 // pred_fallthru
        _
      %p285 = scmp.le.s32.totalorder 2, %s10
      // Predicated region
      $region33: #{tpu_custom_call.1} parent=5 // pred_check
        %p286 = pneg %p285
      $region34: #{tpu_custom_call.1} parent=5 // pred_check_branch
        %288 = sbr.rel (%p286) target = $region36
      $region35: #{tpu_custom_call.1} parent=5 // pred_region
        %s289 = ssub.s32 %s10, 2
        // Predicated region
        $region37: #{tpu_custom_call.1} parent=35 // pred_check
          %p290 = pneg %p65
        $region38: #{tpu_custom_call.1} parent=35 // pred_check_branch
          %292 = sbr.rel (%p290) target = $region40
        $region39: #{tpu_custom_call.1} parent=35 // pred_region
          %p293 = scmp.lt.s32.totalorder %s16, 1
          %s294 = scalar_select %p293, %s16, 1
          %s295 = smul.addr %s294, 2
          %s296 = smul.addr %s295, 8
          %s297 = scalar_lea.vmem %s1, %s296
        $region40: #{tpu_custom_call.1} parent=35 // pred_fallthru
          _
      $region36: #{tpu_custom_call.1} parent=5 // pred_fallthru
        _
    $region6: #{tpu_custom_call.1} parent=1 // loop_footer
      %s14 = sadd.s32 1, %s10
    $region7: #{tpu_custom_call.1} parent=1 // loop_footer_branch
      %9 = sbr.rel target = $region3
    $region8: #{tpu_custom_call.1} parent=1 // loop_exit
      _
    %298 = vsyncpa [#allocation3], 1
    %s299 = scalar_lea.sflag [#allocation3], 1
    %300 = vsyncpa %s299, 1

</llo_original>
